<compile_context>
chip_gen: v6e
topology: v6e:2x2x1
jax: 0.10.0
libtpu: 0.0.40
codegen_flags: <defaults>
</compile_context>

<pallas_src>
import functools
import math

import jax
import jax.numpy as jnp
from jax.experimental import pallas as pl
from jax.experimental.pallas import tpu as pltpu

SEQ_LEN = 40000                      # max_len, same default as the PyTorch module
_TARGET_BLOCK_BYTES = 2 * 1024 * 1024  # ~2 MiB lane-dense blocks (see header)


def _round_up(x: int, m: int) -> int:
    return (x + m - 1) // m * m


def _round_down(x: int, m: int) -> int:
    return (x // m) * m


def make_pe_buffer(d_model: int, max_len: int = SEQ_LEN,
                   dtype=jnp.float32) -> jnp.ndarray:
    """Deterministic positional-encoding buffer, shape (1, d_model, max_len)."""
    position = jnp.arange(0, max_len, dtype=jnp.float32)[:, None]            # (L, 1)
    div_term = jnp.exp(
        jnp.arange(0, d_model, 2, dtype=jnp.float32) * (-math.log(10000.0) / d_model)
    )                                                                          # (ceil(D/2),)
    pe = jnp.zeros((max_len, d_model), dtype=jnp.float32)
    pe = pe.at[:, 0::2].set(jnp.sin(position * div_term))
    # Slice div_term for the cos half so odd d_model doesn't shape-mismatch.
    pe = pe.at[:, 1::2].set(jnp.cos(position * div_term[: d_model // 2]))
    # unsqueeze(0).transpose(1, 2) -> (1, d_model, max_len)
    return jnp.transpose(pe[None, :, :], (0, 2, 1)).astype(dtype)


def _pe_add_kernel(x_ref, pe_ref, o_ref, *, factor: float):
    # x_ref / pe_ref / o_ref are all (D, TL) after the Squeezed batch dim.
    pe = pe_ref[...]
    if factor != 1.0:          # compile-time Python float: skip mul when 1.0
        pe = pe * factor
    o_ref[...] = (x_ref[...] + pe).astype(o_ref.dtype)


def positional_encoding_forward(x: jnp.ndarray,
                                pe: jnp.ndarray,
                                start: int = 0,
                                factor: float = 1.0,
                                target_block_bytes: int = _TARGET_BLOCK_BYTES
                                ) -> jnp.ndarray:
    """x: (B, d_model, L); pe: (1, d_model, max_len)."""
    if not isinstance(factor, (int, float)):
        raise TypeError("factor must be a static Python number (module attribute).")
    B, D, L = x.shape
    max_len = pe.shape[2]
    assert start + L <= max_len, "start + seq_len must not exceed max_len"

    # Pre-cast pe once so its HBM traffic / VMEM block match the activations.
    if pe.dtype != x.dtype:
        pe = pe.astype(x.dtype)

    # Lane tile sized by bytes: multiple of 128, ~target_block_bytes per block.
    itemsize = jnp.dtype(x.dtype).itemsize
    tl = max(128, _round_down(target_block_bytes // (D * itemsize), 128))
    TL = min(tl, _round_up(L, 128))

    if start % 128 == 0:
        if start != 0 and start % TL != 0:
            # Largest 128-multiple that divides start (both args are 128-multiples).
            TL = math.gcd(start, TL)
        pe_in = pe                                   # full buffer, no copy
        start_blk = start // TL
        pe_map = lambda l, b, _s=start_blk: (0, 0, l + _s)
    else:
        # Rare unaligned start: one XLA slice over pe (see TODO in header).
        pe_in = jax.lax.dynamic_slice(pe, (0, 0, start), (1, D, L))
        pe_map = lambda l, b: (0, 0, l)

    num_l = pl.cdiv(L, TL)
    kernel = functools.partial(_pe_add_kernel, factor=float(factor))
    out_shape = jax.ShapeDtypeStruct((B, D, L), x.dtype)

    def _call(single_buffer_pe: bool):
        x_spec = pl.BlockSpec((pl.Squeezed(), D, TL), lambda l, b: (b, 0, l))
        o_spec = pl.BlockSpec((pl.Squeezed(), D, TL), lambda l, b: (b, 0, l))
        if single_buffer_pe:
            # pe's block only changes once every B inner steps -> single buffer.
            pe_spec = pl.BlockSpec((pl.Squeezed(), D, TL), pe_map,
                                   pipeline_mode=pl.Buffered(1))
        else:
            pe_spec = pl.BlockSpec((pl.Squeezed(), D, TL), pe_map)
        return pl.pallas_call(
            kernel,
            out_shape=out_shape,
            # B innermost so the shared pe block stays resident across the batch;
            # both axes "parallel" so v7x megacore splits work even when num_l==1.
            grid=(num_l, B),
            in_specs=[x_spec, pe_spec],
            out_specs=o_spec,
            compiler_params=pltpu.CompilerParams(
                dimension_semantics=("parallel", "parallel")),
        )(x, pe_in)

    try:
        return _call(True)
    except Exception:
        # Fallback for jax versions without Buffered(1) support on pallas_call.
        return _call(False)


if __name__ == "__main__":
    k1, k2 = jax.random.split(jax.random.PRNGKey(0))

    # Case 1: x is (batch, d_model, seq_len); start=0, factor=1.0 (default module).
    B, D, L = 2, 16, 128
    x1 = jax.random.normal(k1, (B, D, L), dtype=jnp.float32)
    pe = make_pe_buffer(D, SEQ_LEN)

    out1 = jax.block_until_ready(positional_encoding_forward(x1, pe, start=0, factor=1.0))
    ref1 = x1 + 1.0 * jax.lax.dynamic_slice(pe, (0, 0, 0), (1, D, L))
    assert out1.shape == (B, D, L)
    assert jnp.allclose(out1, ref1, atol=1e-6), "mismatch vs reference (case 1)"

    # Case 2: 128-aligned nonzero start, L not a multiple of 128, factor != 1.
    L2, start2, factor2 = 200, 256, 0.5
    x2 = jax.random.normal(k2, (B, D, L2), dtype=jnp.float32)
    out2 = jax.block_until_ready(
        positional_encoding_forward(x2, pe, start=start2, factor=factor2))
    ref2 = x2 + factor2 * jax.lax.dynamic_slice(pe, (0, 0, start2), (1, D, L2))
    assert out2.shape == (B, D, L2)
    assert jnp.allclose(out2, ref2, atol=1e-6), "mismatch vs reference (case 2)"

    print("KERNEL_OK")
</pallas_src>

<mosaic_0001>
module attributes {stable_mosaic.version = 11 : i64} {
  func.func @_pe_add_kernel(%arg0: i32, %arg1: i32, %arg2: memref<1x16x128xf32, #tpu.memory_space<vmem>>, %arg3: memref<1x16x128xf32, #tpu.memory_space<vmem>>, %arg4: memref<1x16x128xf32, #tpu.memory_space<vmem>>) attributes {dimension_semantics = [#tpu.dimension_semantics<parallel>, #tpu.dimension_semantics<parallel>], iteration_bounds = array<i64: 1, 2>, scalar_prefetch = 0 : i64, scratch_operands = 0 : i64, tpu.core_type = #tpu.core_type<tc>, window_params = [{transform_indices = @transform_0, window_bounds = array<i64: 1, 16, 128>}, {pipeline_mode = #tpu.pipeline_mode<synchronous>, transform_indices = @transform_1, window_bounds = array<i64: 1, 16, 128>}, {transform_indices = @transform_2, window_bounds = array<i64: 1, 16, 128>}]} {
    %c0 = arith.constant 0 : index
    %c0_0 = arith.constant 0 : index
    %c0_1 = arith.constant 0 : index
    %0 = vector.load %arg3[%c0, %c0_0, %c0_1] : memref<1x16x128xf32, #tpu.memory_space<vmem>>, vector<1x16x128xf32>
    %1 = vector.shape_cast %0 : vector<1x16x128xf32> to vector<16x128xf32>
    %c0_2 = arith.constant 0 : index
    %c0_3 = arith.constant 0 : index
    %c0_4 = arith.constant 0 : index
    %2 = vector.load %arg2[%c0_2, %c0_3, %c0_4] : memref<1x16x128xf32, #tpu.memory_space<vmem>>, vector<1x16x128xf32>
    %3 = vector.shape_cast %2 : vector<1x16x128xf32> to vector<16x128xf32>
    %4 = arith.addf %3, %1 : vector<16x128xf32>
    %c0_5 = arith.constant 0 : index
    %c0_6 = arith.constant 0 : index
    %c0_7 = arith.constant 0 : index
    %5 = vector.load %arg4[%c0_5, %c0_6, %c0_7] : memref<1x16x128xf32, #tpu.memory_space<vmem>>, vector<1x16x128xf32>
    %6 = vector.shape_cast %5 : vector<1x16x128xf32> to vector<16x128xf32>
    %7 = vector.shape_cast %4 : vector<16x128xf32> to vector<1x16x128xf32>
    tpu.vector_store %arg4[%c0_5, %c0_6, %c0_7], %7 {strides = array<i32>} : memref<1x16x128xf32, #tpu.memory_space<vmem>>, vector<1x16x128xf32>,
    return
  }
  func.func @transform_0(%arg0: i32, %arg1: i32) -> (i32, i32, i32) {
    %c0_i32 = arith.constant 0 : i32
    %c0_i32_0 = arith.constant 0 : i32
    return %arg1, %c0_i32, %arg0 : i32, i32, i32
  }
  func.func @transform_1(%arg0: i32, %arg1: i32) -> (i32, i32, i32) {
    %c0_i32 = arith.constant 0 : i32
    %0 = arith.addi %arg0, %c0_i32 : i32
    %c0_i32_0 = arith.constant 0 : i32
    %c0_i32_1 = arith.constant 0 : i32
    %c0_i32_2 = arith.constant 0 : i32
    return %c0_i32_0, %c0_i32_1, %0 : i32, i32, i32
  }
  func.func @transform_2(%arg0: i32, %arg1: i32) -> (i32, i32, i32) {
    %c0_i32 = arith.constant 0 : i32
    %c0_i32_0 = arith.constant 0 : i32
    return %arg1, %c0_i32, %arg0 : i32, i32, i32
  }
}

module attributes {stable_mosaic.version = 11 : i64} {
  func.func @_pe_add_kernel(%arg0: i32, %arg1: i32, %arg2: memref<1x16x128xf32, #tpu.memory_space<vmem>>, %arg3: memref<1x16x128xf32, #tpu.memory_space<vmem>>, %arg4: memref<1x16x128xf32, #tpu.memory_space<vmem>>) attributes {dimension_semantics = [#tpu.dimension_semantics<parallel>, #tpu.dimension_semantics<parallel>], iteration_bounds = array<i64: 1, 2>, scalar_prefetch = 0 : i64, scratch_operands = 0 : i64, tpu.core_type = #tpu.core_type<tc>, window_params = [{transform_indices = @transform_0, window_bounds = array<i64: 1, 16, 128>}, {transform_indices = @transform_1, window_bounds = array<i64: 1, 16, 128>}, {transform_indices = @transform_2, window_bounds = array<i64: 1, 16, 128>}]} {
    %c0 = arith.constant 0 : index
    %c0_0 = arith.constant 0 : index
    %c0_1 = arith.constant 0 : index
    %0 = vector.load %arg3[%c0, %c0_0, %c0_1] : memref<1x16x128xf32, #tpu.memory_space<vmem>>, vector<1x16x128xf32>
    %1 = vector.shape_cast %0 : vector<1x16x128xf32> to vector<16x128xf32>
    %c0_2 = arith.constant 0 : index
    %c0_3 = arith.constant 0 : index
    %c0_4 = arith.constant 0 : index
    %2 = vector.load %arg2[%c0_2, %c0_3, %c0_4] : memref<1x16x128xf32, #tpu.memory_space<vmem>>, vector<1x16x128xf32>
    %3 = vector.shape_cast %2 : vector<1x16x128xf32> to vector<16x128xf32>
    %4 = arith.addf %3, %1 : vector<16x128xf32>
    %c0_5 = arith.constant 0 : index
    %c0_6 = arith.constant 0 : index
    %c0_7 = arith.constant 0 : index
    %5 = vector.load %arg4[%c0_5, %c0_6, %c0_7] : memref<1x16x128xf32, #tpu.memory_space<vmem>>, vector<1x16x128xf32>
    %6 = vector.shape_cast %5 : vector<1x16x128xf32> to vector<16x128xf32>
    %7 = vector.shape_cast %4 : vector<16x128xf32> to vector<1x16x128xf32>
    tpu.vector_store %arg4[%c0_5, %c0_6, %c0_7], %7 {strides = array<i32>} : memref<1x16x128xf32, #tpu.memory_space<vmem>>, vector<1x16x128xf32>,
    return
  }
  func.func @transform_0(%arg0: i32, %arg1: i32) -> (i32, i32, i32) {
    %c0_i32 = arith.constant 0 : i32
    %c0_i32_0 = arith.constant 0 : i32
    return %arg1, %c0_i32, %arg0 : i32, i32, i32
  }
  func.func @transform_1(%arg0: i32, %arg1: i32) -> (i32, i32, i32) {
    %c0_i32 = arith.constant 0 : i32
    %0 = arith.addi %arg0, %c0_i32 : i32
    %c0_i32_0 = arith.constant 0 : i32
    %c0_i32_1 = arith.constant 0 : i32
    %c0_i32_2 = arith.constant 0 : i32
    return %c0_i32_0, %c0_i32_1, %0 : i32, i32, i32
  }
  func.func @transform_2(%arg0: i32, %arg1: i32) -> (i32, i32, i32) {
    %c0_i32 = arith.constant 0 : i32
    %c0_i32_0 = arith.constant 0 : i32
    return %arg1, %c0_i32, %arg0 : i32, i32, i32
  }
}

</mosaic_0001>

<llo_original>
// kernel: tpu_custom_call.1
$region0: #{tpu_custom_call.1}
  #allocation0 [shape = 'u32[]', space=smem, size = 0x4, offset = 0x4, fixed_abs, tag = 'smem constant byte address 0x4 - core index']
  #allocation1 [shape = 'u32[144,128]{1,0:T(1,128)}', space=vmem, size = 0x12000, scoped, tag = 'internal scratch']
  %s0 = inlined_call_operand.hbm [shape: f32[2,16,128], index: 0, kind: input, shape index: {}]
  %s1 = inlined_call_operand.hbm [shape: f32[1,16,40000], index: 1, kind: input, shape index: {}]
  %s2 = inlined_call_operand.hbm [shape: f32[2,16,128], index: 2, kind: output, shape index: {}]
  %s3 = sld [smem:[#allocation0]]
  $region49: #{tpu_custom_call.1} parent=0
    _
  %s5 = ssub.s32 1, %s3
  %s6 = scalar_select 0, %s5, %s3
  $region1: #{tpu_custom_call.1} parent=0
    #allocation2 [shape = 'u8[16384]{0}', space=vmem, size = 0x4000, scoped, tag = 'input window, operand 0']
    #allocation3 [shape = 's32[2]{0}', space=sflag, size = 0x8, scoped, tag = 'scoped memory for tpu_custom_call.1']
    #allocation4 [shape = 's32[2]{0}', space=sflag, size = 0x8, scoped, tag = 'scoped memory for tpu_custom_call.1']
    #allocation5 [shape = 'u8[8192]{0}', space=vmem, size = 0x2000, scoped, tag = 'input window, operand 1, single buffered']
    #allocation6 [shape = 's32[1]{0}', space=sflag, size = 0x4, scoped, tag = 'scoped memory for tpu_custom_call.1']
    #allocation7 [shape = 'u8[16384]{0}', space=vmem, size = 0x4000, scoped, tag = 'output window, operand 0']
    %7 = vsyncpa [#allocation3], 0
    %s8 = scalar_lea.sflag [#allocation3], 1
    %9 = vsyncpa %s8, 0
    %10 = vsyncpa [#allocation6], 0
    %11 = vsyncpa [#allocation4], 0
    %s12 = scalar_lea.sflag [#allocation4], 1
    %13 = vsyncpa %s12, 0
    loop: start=0, step=1, limit=4
    $region2: #{tpu_custom_call.1} parent=1 // loop_pre_header
      _
    $region3: #{tpu_custom_call.1} parent=1 // loop_header
      %s15 = sphi 0, %s19
      %p16 = scmp.ge.s32.totalorder %s15, 4
      %s22 = sphi 0, %s34
      %s23 = sphi 0, %s30
      %s24 = sphi 0, %s22
      %s25 = sphi 0, %s23
      %s26 = sphi 0, %s24
      %s27 = sphi 0, %s25
      %s39 = sphi 0, %s41
      %s42 = sphi 0, %s39
      %s43 = sphi 0, %s42
      %s59 = sphi 0, %s43
      %s65 = sphi 0, %s67
      %s68 = sphi 0, %s65
      %s69 = sphi 0, %s68
      %s85 = sphi 0, %s69
      %s93 = sphi 0, %s95
      %s96 = sphi 0, %s93
      %s97 = sphi 0, %s96
      %s113 = sphi 0, %s97
    $region4: #{tpu_custom_call.1} parent=1 // loop_header_branch
      %18 = sbr.rel (%p16) target = $region8
    $region5: #{tpu_custom_call.1} parent=1 // loop_body
      %s20 = ssub.s32 %s15, 1
      %s21 = ssub.s32 %s15, 2
      %s28 = sadd.s32 1, %s23
      %p29 = scmp.ge.s32.totalorder %s28, 2
      %s30 = scalar_select %p29, 0, %s28
      %s31 = sadd.s32 1, %s22
      %s32 = scalar_select %p29, %s31, %s22
      %p33 = scmp.ge.s32.totalorder %s32, 1
      %s34 = scalar_select %p33, 0, %s32
      %s35 = ssub.s32 %s23, %s30
      %s36 = ssub.s32 %s22, %s34
      %s37 = sor.u32 %s35, %s36
      %p38 = scmp.eq.s32.totalorder %s37, 0
      %s40 = sadd.s32 %s39, 1
      %s41 = scalar_select %p38, %s39, %s40
      %p44 = pneg %p38
      %p45 = scmp.eq.s32.totalorder %s15, 1
      %p46 = por %p44, %p45
      %p47 = scmp.ne.s32.totalorder %s39, %s42
      %p48 = scmp.eq.s32.totalorder %s15, 0
      %p49 = por %p47, %p48
      %p50 = scmp.ne.s32.totalorder %s39, %s42
      %p51 = scmp.eq.s32.totalorder %s20, 1
      %p52 = por %p50, %p51
      %p53 = scmp.ne.s32.totalorder %s42, %s43
      %p54 = scmp.eq.s32.totalorder %s20, 0
      %p55 = por %p53, %p54
      %p56 = scmp.ne.s32.totalorder %s42, %s43
      %p57 = scmp.eq.s32.totalorder %s21, 1
      %p58 = por %p56, %p57
      %p60 = scmp.ne.s32.totalorder %s43, %s59
      %p61 = scmp.eq.s32.totalorder %s21, 0
      %p62 = por %p60, %p61
      %s63 = ssub.s32 %s22, %s34
      %p64 = scmp.eq.s32.totalorder %s63, 0
      %s66 = sadd.s32 %s65, 1
      %s67 = scalar_select %p64, %s65, %s66
      %p70 = pneg %p64
      %p71 = scmp.eq.s32.totalorder %s15, 1
      %p72 = por %p70, %p71
      %p73 = scmp.ne.s32.totalorder %s65, %s68
      %p74 = scmp.eq.s32.totalorder %s15, 0
      %p75 = por %p73, %p74
      %p76 = scmp.ne.s32.totalorder %s65, %s68
      %p77 = scmp.eq.s32.totalorder %s20, 1
      %p78 = por %p76, %p77
      %p79 = scmp.ne.s32.totalorder %s68, %s69
      %p80 = scmp.eq.s32.totalorder %s20, 0
      %p81 = por %p79, %p80
      %p82 = scmp.ne.s32.totalorder %s68, %s69
      %p83 = scmp.eq.s32.totalorder %s21, 1
      %p84 = por %p82, %p83
      %p86 = scmp.ne.s32.totalorder %s69, %s85
      %p87 = scmp.eq.s32.totalorder %s21, 0
      %p88 = por %p86, %p87
      %s89 = ssub.s32 %s23, %s30
      %s90 = ssub.s32 %s22, %s34
      %s91 = sor.u32 %s89, %s90
      %p92 = scmp.eq.s32.totalorder %s91, 0
      %s94 = sadd.s32 %s93, 1
      %s95 = scalar_select %p92, %s93, %s94
      %p98 = pneg %p92
      %p99 = scmp.eq.s32.totalorder %s15, 1
      %p100 = por %p98, %p99
      %p101 = scmp.ne.s32.totalorder %s93, %s96
      %p102 = scmp.eq.s32.totalorder %s15, 0
      %p103 = por %p101, %p102
      %p104 = scmp.ne.s32.totalorder %s93, %s96
      %p105 = scmp.eq.s32.totalorder %s20, 1
      %p106 = por %p104, %p105
      %p107 = scmp.ne.s32.totalorder %s96, %s97
      %p108 = scmp.eq.s32.totalorder %s20, 0
      %p109 = por %p107, %p108
      %p110 = scmp.ne.s32.totalorder %s96, %s97
      %p111 = scmp.eq.s32.totalorder %s21, 1
      %p112 = por %p110, %p111
      %p114 = scmp.ne.s32.totalorder %s97, %s113
      %p115 = scmp.eq.s32.totalorder %s21, 0
      %p116 = por %p114, %p115
      %p117 = scmp.le.s32.totalorder 1, %s15
      %p118 = scmp.lt.s32.totalorder %s15, 3
      %p119 = pnand %p117, %p118
      %p120 = pneg %p119
      // Predicated region
      $region9: #{tpu_custom_call.1} parent=5 // pred_check
        _
      $region10: #{tpu_custom_call.1} parent=5 // pred_check_branch
        %122 = sbr.rel (%p119) target = $region12
      $region11: #{tpu_custom_call.1} parent=5 // pred_region
        %s123 = ssub.s32 %s15, 1
        // Predicated region
        $region13: #{tpu_custom_call.1} parent=11 // pred_check
          %p124 = pneg %p81
        $region14: #{tpu_custom_call.1} parent=11 // pred_check_branch
          %126 = sbr.rel (%p124) target = $region16
        $region15: #{tpu_custom_call.1} parent=11 // pred_region
          %s128 = ssub.s32 256, 256
          %129 = vsyncadd [#allocation6], %s128
          %s130 = smul.addr %s24, 128
          %s131 = scalar_lea.hbm %s1, %s130
          %s132 = sshll.u32 [#allocation5], 4
          %s133 = int_to_ptr.vmem [resolvable:$true] %s132
          %138 = dma.hbm_to_vmem [thread:$0]  %s131, 256, %s133, [#allocation6], 40064, 128, 8
        $region16: #{tpu_custom_call.1} parent=11 // pred_fallthru
          _
      $region12: #{tpu_custom_call.1} parent=5 // pred_fallthru
        _
      %p139 = scmp.lt.s32.totalorder %s15, 2
      // Predicated region
      $region17: #{tpu_custom_call.1} parent=5 // pred_check
        %p140 = pneg %p139
      $region18: #{tpu_custom_call.1} parent=5 // pred_check_branch
        %142 = sbr.rel (%p140) target = $region20
      $region19: #{tpu_custom_call.1} parent=5 // pred_region
        // Predicated region
        $region21: #{tpu_custom_call.1} parent=19 // pred_check
          %p143 = pneg %p49
        $region22: #{tpu_custom_call.1} parent=19 // pred_check_branch
          %145 = sbr.rel (%p143) target = $region24
        $region23: #{tpu_custom_call.1} parent=19 // pred_region
          %s146 = sand.u32 %s39, 1
          %s147 = scalar_lea.sflag [#allocation3], %s146
          %s148 = sand.u32 %s39, 1
          %s149 = smul.addr %s148, 16
          %s150 = scalar_lea.vmem [#allocation2], %s149
          %s152 = ssub.s32 256, 256
          %153 = vsyncadd %s147, %s152
          %s154 = smul.addr %s23, 2
          %s155 = sadd.s32 %s22, %s154
          %s156 = smul.addr %s155, 128
          %s157 = scalar_lea.hbm %s0, %s156
          %s158 = sshll.u32 %s150, 4
          %s159 = int_to_ptr.vmem [resolvable:$true] %s158
          %164 = dma.hbm_to_vmem [thread:$0]  %s157, 256, %s159, %s147, 128, 128, 8
        $region24: #{tpu_custom_call.1} parent=19 // pred_fallthru
          _
      $region20: #{tpu_custom_call.1} parent=5 // pred_fallthru
        _
      %p165 = scmp.le.s32.totalorder 1, %s15
      %p166 = scmp.lt.s32.totalorder %s15, 3
      %p167 = pnand %p165, %p166
      %p168 = pneg %p167
      // Predicated region
      $region25: #{tpu_custom_call.1} parent=5 // pred_check
        _
      $region26: #{tpu_custom_call.1} parent=5 // pred_check_branch
        %170 = sbr.rel (%p167) target = $region28
      $region27: #{tpu_custom_call.1} parent=5 // pred_region
        %s171 = ssub.s32 %s15, 1
        %s172 = sand.u32 %s42, 1
        %s173 = scalar_lea.sflag [#allocation3], %s172
        %s174 = sand.u32 %s42, 1
        %s175 = smul.addr %s174, 16
        %s176 = scalar_lea.vmem [#allocation2], %s175
        // Predicated region
        $region29: #{tpu_custom_call.1} parent=27 // pred_check
          %p177 = pneg %p55
        $region30: #{tpu_custom_call.1} parent=27 // pred_check_branch
          %179 = sbr.rel (%p177) target = $region32
        $region31: #{tpu_custom_call.1} parent=27 // pred_region
          %180 = dma.done %s173, 256
        $region32: #{tpu_custom_call.1} parent=27 // pred_fallthru
          _
        // Predicated region
        $region33: #{tpu_custom_call.1} parent=27 // pred_check
          %p181 = pneg %p81
        $region34: #{tpu_custom_call.1} parent=27 // pred_check_branch
          %183 = sbr.rel (%p181) target = $region36
        $region35: #{tpu_custom_call.1} parent=27 // pred_region
          %184 = dma.done [#allocation6], 256
        $region36: #{tpu_custom_call.1} parent=27 // pred_fallthru
          _
        %s185 = sand.u32 %s42, 1
        %s186 = scalar_lea.sflag [#allocation3], %s185
        %s187 = sand.u32 %s42, 1
        %s188 = smul.addr %s187, 16
        %s189 = scalar_lea.vmem [#allocation2], %s188
        %p190 = pneg %p55
        %p191 = pneg %p52
        %p192 = pneg %p81
        %p193 = pneg %p78
        %p194 = pneg %p109
        %p195 = pneg %p106
        %s196 = sand.u32 %s96, 1
        %s197 = scalar_lea.sflag [#allocation4], %s196
        %s198 = sand.u32 %s96, 1
        %s199 = smul.addr %s198, 16
        %s200 = scalar_lea.vmem [#allocation7], %s199
        %v201 = vld [vmem:[#allocation5] sm:$0xff]
        %v202 = vld [vmem:[#allocation5 + $0x8] sm:$0xff]
        %v203 = vld [vmem:[%s176] sm:$0xff]
        %v204 = vld [vmem:[%s176 + $0x8] sm:$0xff]
        %v205 = vadd.f32 %v203, %v201
        %v206 = vadd.f32 %v204, %v202
        %207 = vst [vmem:[%s200] sm:$0xff] %v205
        %208 = vst [vmem:[%s200 + $0x8] sm:$0xff] %v206
        %s209 = sand.u32 %s96, 1
        %s210 = scalar_lea.sflag [#allocation4], %s209
        %s211 = sand.u32 %s96, 1
        %s212 = smul.addr %s211, 16
        %s213 = scalar_lea.vmem [#allocation7], %s212
        // Predicated region
        $region37: #{tpu_custom_call.1} parent=27 // pred_check
          %p214 = pneg %p106
        $region38: #{tpu_custom_call.1} parent=27 // pred_check_branch
          %216 = sbr.rel (%p214) target = $region40
        $region39: #{tpu_custom_call.1} parent=27 // pred_region
          %s218 = ssub.s32 256, 256
          %219 = vsyncadd %s210, %s218
          %s220 = smul.addr %s25, 2
          %s221 = sadd.s32 %s24, %s220
          %s222 = smul.addr %s221, 128
          %s223 = scalar_lea.hbm %s2, %s222
          %s224 = sshll.u32 %s213, 4
          %s225 = int_to_ptr.vmem [resolvable:$true] %s224
          %230 = dma.vmem_to_hbm [thread:$0]  %s225, 256, %s223, %s210, 128, 128, 8
        $region40: #{tpu_custom_call.1} parent=27 // pred_fallthru
          _
      $region28: #{tpu_custom_call.1} parent=5 // pred_fallthru
        _
      %p231 = scmp.le.s32.totalorder 2, %s15
      // Predicated region
      $region41: #{tpu_custom_call.1} parent=5 // pred_check
        %p232 = pneg %p231
      $region42: #{tpu_custom_call.1} parent=5 // pred_check_branch
        %234 = sbr.rel (%p232) target = $region44
      $region43: #{tpu_custom_call.1} parent=5 // pred_region
        %s235 = ssub.s32 %s15, 2
        // Predicated region
        $region45: #{tpu_custom_call.1} parent=43 // pred_check
          %p236 = pneg %p112
        $region46: #{tpu_custom_call.1} parent=43 // pred_check_branch
          %238 = sbr.rel (%p236) target = $region48
        $region47: #{tpu_custom_call.1} parent=43 // pred_region
          %s239 = sand.u32 %s97, 1
          %s240 = scalar_lea.sflag [#allocation4], %s239
          %s241 = sand.u32 %s97, 1
          %s242 = smul.addr %s241, 16
          %s243 = scalar_lea.vmem [#allocation7], %s242
          %244 = dma.done %s240, 256
        $region48: #{tpu_custom_call.1} parent=43 // pred_fallthru
          _
      $region44: #{tpu_custom_call.1} parent=5 // pred_fallthru
        _
    $region6: #{tpu_custom_call.1} parent=1 // loop_footer
      %s19 = sadd.s32 1, %s15
    $region7: #{tpu_custom_call.1} parent=1 // loop_footer_branch
      %14 = sbr.rel target = $region3
    $region8: #{tpu_custom_call.1} parent=1 // loop_exit
      _
    %245 = vsyncpa [#allocation3], 1
    %s246 = scalar_lea.sflag [#allocation3], 1
    %247 = vsyncpa %s246, 1
    %248 = vsyncpa [#allocation6], 1
    %249 = vsyncpa [#allocation4], 1
    %s250 = scalar_lea.sflag [#allocation4], 1
    %251 = vsyncpa %s250, 1

// kernel: tpu_custom_call.1
$region0: #{tpu_custom_call.1}
  #allocation0 [shape = 'u32[]', space=smem, size = 0x4, offset = 0x4, fixed_abs, tag = 'smem constant byte address 0x4 - core index']
  #allocation1 [shape = 'u32[144,128]{1,0:T(1,128)}', space=vmem, size = 0x12000, scoped, tag = 'internal scratch']
  %s0 = inlined_call_operand.hbm [shape: f32[2,16,128], index: 0, kind: input, shape index: {}]
  %s1 = inlined_call_operand.hbm [shape: f32[1,16,40000], index: 1, kind: input, shape index: {}]
  %s2 = inlined_call_operand.hbm [shape: f32[2,16,128], index: 2, kind: output, shape index: {}]
  %s3 = sld [smem:[#allocation0]]
  $region49: #{tpu_custom_call.1} parent=0
    _
  %s5 = ssub.s32 1, %s3
  %s6 = scalar_select 0, %s5, %s3
  $region1: #{tpu_custom_call.1} parent=0
    #allocation2 [shape = 'u8[16384]{0}', space=vmem, size = 0x4000, scoped, tag = 'input window, operand 0']
    #allocation3 [shape = 's32[2]{0}', space=sflag, size = 0x8, scoped, tag = 'scoped memory for tpu_custom_call.1']
    #allocation4 [shape = 's32[2]{0}', space=sflag, size = 0x8, scoped, tag = 'scoped memory for tpu_custom_call.1']
    #allocation5 [shape = 'u8[8192]{0}', space=vmem, size = 0x2000, scoped, tag = 'input window, operand 1, single buffered']
    #allocation6 [shape = 's32[1]{0}', space=sflag, size = 0x4, scoped, tag = 'scoped memory for tpu_custom_call.1']
    #allocation7 [shape = 'u8[16384]{0}', space=vmem, size = 0x4000, scoped, tag = 'output window, operand 0']
    %7 = vsyncpa [#allocation3], 0
    %s8 = scalar_lea.sflag [#allocation3], 1
    %9 = vsyncpa %s8, 0
    %10 = vsyncpa [#allocation6], 0
    %11 = vsyncpa [#allocation4], 0
    %s12 = scalar_lea.sflag [#allocation4], 1
    %13 = vsyncpa %s12, 0
    loop: start=0, step=1, limit=4
    $region2: #{tpu_custom_call.1} parent=1 // loop_pre_header
      _
    $region3: #{tpu_custom_call.1} parent=1 // loop_header
      %s15 = sphi 0, %s19
      %p16 = scmp.ge.s32.totalorder %s15, 4
      %s22 = sphi 0, %s34
      %s23 = sphi 0, %s30
      %s24 = sphi 0, %s22
      %s25 = sphi 0, %s23
      %s26 = sphi 0, %s24
      %s27 = sphi 0, %s25
      %s39 = sphi 0, %s41
      %s42 = sphi 0, %s39
      %s43 = sphi 0, %s42
      %s59 = sphi 0, %s43
      %s65 = sphi 0, %s67
      %s68 = sphi 0, %s65
      %s69 = sphi 0, %s68
      %s85 = sphi 0, %s69
      %s93 = sphi 0, %s95
      %s96 = sphi 0, %s93
      %s97 = sphi 0, %s96
      %s113 = sphi 0, %s97
    $region4: #{tpu_custom_call.1} parent=1 // loop_header_branch
      %18 = sbr.rel (%p16) target = $region8
    $region5: #{tpu_custom_call.1} parent=1 // loop_body
      %s20 = ssub.s32 %s15, 1
      %s21 = ssub.s32 %s15, 2
      %s28 = sadd.s32 1, %s23
      %p29 = scmp.ge.s32.totalorder %s28, 2
      %s30 = scalar_select %p29, 0, %s28
      %s31 = sadd.s32 1, %s22
      %s32 = scalar_select %p29, %s31, %s22
      %p33 = scmp.ge.s32.totalorder %s32, 1
      %s34 = scalar_select %p33, 0, %s32
      %s35 = ssub.s32 %s23, %s30
      %s36 = ssub.s32 %s22, %s34
      %s37 = sor.u32 %s35, %s36
      %p38 = scmp.eq.s32.totalorder %s37, 0
      %s40 = sadd.s32 %s39, 1
      %s41 = scalar_select %p38, %s39, %s40
      %p44 = pneg %p38
      %p45 = scmp.eq.s32.totalorder %s15, 1
      %p46 = por %p44, %p45
      %p47 = scmp.ne.s32.totalorder %s39, %s42
      %p48 = scmp.eq.s32.totalorder %s15, 0
      %p49 = por %p47, %p48
      %p50 = scmp.ne.s32.totalorder %s39, %s42
      %p51 = scmp.eq.s32.totalorder %s20, 1
      %p52 = por %p50, %p51
      %p53 = scmp.ne.s32.totalorder %s42, %s43
      %p54 = scmp.eq.s32.totalorder %s20, 0
      %p55 = por %p53, %p54
      %p56 = scmp.ne.s32.totalorder %s42, %s43
      %p57 = scmp.eq.s32.totalorder %s21, 1
      %p58 = por %p56, %p57
      %p60 = scmp.ne.s32.totalorder %s43, %s59
      %p61 = scmp.eq.s32.totalorder %s21, 0
      %p62 = por %p60, %p61
      %s63 = ssub.s32 %s22, %s34
      %p64 = scmp.eq.s32.totalorder %s63, 0
      %s66 = sadd.s32 %s65, 1
      %s67 = scalar_select %p64, %s65, %s66
      %p70 = pneg %p64
      %p71 = scmp.eq.s32.totalorder %s15, 1
      %p72 = por %p70, %p71
      %p73 = scmp.ne.s32.totalorder %s65, %s68
      %p74 = scmp.eq.s32.totalorder %s15, 0
      %p75 = por %p73, %p74
      %p76 = scmp.ne.s32.totalorder %s65, %s68
      %p77 = scmp.eq.s32.totalorder %s20, 1
      %p78 = por %p76, %p77
      %p79 = scmp.ne.s32.totalorder %s68, %s69
      %p80 = scmp.eq.s32.totalorder %s20, 0
      %p81 = por %p79, %p80
      %p82 = scmp.ne.s32.totalorder %s68, %s69
      %p83 = scmp.eq.s32.totalorder %s21, 1
      %p84 = por %p82, %p83
      %p86 = scmp.ne.s32.totalorder %s69, %s85
      %p87 = scmp.eq.s32.totalorder %s21, 0
      %p88 = por %p86, %p87
      %s89 = ssub.s32 %s23, %s30
      %s90 = ssub.s32 %s22, %s34
      %s91 = sor.u32 %s89, %s90
      %p92 = scmp.eq.s32.totalorder %s91, 0
      %s94 = sadd.s32 %s93, 1
      %s95 = scalar_select %p92, %s93, %s94
      %p98 = pneg %p92
      %p99 = scmp.eq.s32.totalorder %s15, 1
      %p100 = por %p98, %p99
      %p101 = scmp.ne.s32.totalorder %s93, %s96
      %p102 = scmp.eq.s32.totalorder %s15, 0
      %p103 = por %p101, %p102
      %p104 = scmp.ne.s32.totalorder %s93, %s96
      %p105 = scmp.eq.s32.totalorder %s20, 1
      %p106 = por %p104, %p105
      %p107 = scmp.ne.s32.totalorder %s96, %s97
      %p108 = scmp.eq.s32.totalorder %s20, 0
      %p109 = por %p107, %p108
      %p110 = scmp.ne.s32.totalorder %s96, %s97
      %p111 = scmp.eq.s32.totalorder %s21, 1
      %p112 = por %p110, %p111
      %p114 = scmp.ne.s32.totalorder %s97, %s113
      %p115 = scmp.eq.s32.totalorder %s21, 0
      %p116 = por %p114, %p115
      %p117 = scmp.le.s32.totalorder 1, %s15
      %p118 = scmp.lt.s32.totalorder %s15, 3
      %p119 = pnand %p117, %p118
      %p120 = pneg %p119
      // Predicated region
      $region9: #{tpu_custom_call.1} parent=5 // pred_check
        _
      $region10: #{tpu_custom_call.1} parent=5 // pred_check_branch
        %122 = sbr.rel (%p119) target = $region12
      $region11: #{tpu_custom_call.1} parent=5 // pred_region
        %s123 = ssub.s32 %s15, 1
        // Predicated region
        $region13: #{tpu_custom_call.1} parent=11 // pred_check
          %p124 = pneg %p81
        $region14: #{tpu_custom_call.1} parent=11 // pred_check_branch
          %126 = sbr.rel (%p124) target = $region16
        $region15: #{tpu_custom_call.1} parent=11 // pred_region
          %s128 = ssub.s32 256, 256
          %129 = vsyncadd [#allocation6], %s128
          %s130 = smul.addr %s24, 128
          %s131 = scalar_lea.hbm %s1, %s130
          %s132 = sshll.u32 [#allocation5], 4
          %s133 = int_to_ptr.vmem [resolvable:$true] %s132
          %138 = dma.hbm_to_vmem [thread:$0]  %s131, 256, %s133, [#allocation6], 40064, 128, 8
        $region16: #{tpu_custom_call.1} parent=11 // pred_fallthru
          _
      $region12: #{tpu_custom_call.1} parent=5 // pred_fallthru
        _
      %p139 = scmp.lt.s32.totalorder %s15, 2
      // Predicated region
      $region17: #{tpu_custom_call.1} parent=5 // pred_check
        %p140 = pneg %p139
      $region18: #{tpu_custom_call.1} parent=5 // pred_check_branch
        %142 = sbr.rel (%p140) target = $region20
      $region19: #{tpu_custom_call.1} parent=5 // pred_region
        // Predicated region
        $region21: #{tpu_custom_call.1} parent=19 // pred_check
          %p143 = pneg %p49
        $region22: #{tpu_custom_call.1} parent=19 // pred_check_branch
          %145 = sbr.rel (%p143) target = $region24
        $region23: #{tpu_custom_call.1} parent=19 // pred_region
          %s146 = sand.u32 %s39, 1
          %s147 = scalar_lea.sflag [#allocation3], %s146
          %s148 = sand.u32 %s39, 1
          %s149 = smul.addr %s148, 16
          %s150 = scalar_lea.vmem [#allocation2], %s149
          %s152 = ssub.s32 256, 256
          %153 = vsyncadd %s147, %s152
          %s154 = smul.addr %s23, 2
          %s155 = sadd.s32 %s22, %s154
          %s156 = smul.addr %s155, 128
          %s157 = scalar_lea.hbm %s0, %s156
          %s158 = sshll.u32 %s150, 4
          %s159 = int_to_ptr.vmem [resolvable:$true] %s158
          %164 = dma.hbm_to_vmem [thread:$0]  %s157, 256, %s159, %s147, 128, 128, 8
        $region24: #{tpu_custom_call.1} parent=19 // pred_fallthru
          _
      $region20: #{tpu_custom_call.1} parent=5 // pred_fallthru
        _
      %p165 = scmp.le.s32.totalorder 1, %s15
      %p166 = scmp.lt.s32.totalorder %s15, 3
      %p167 = pnand %p165, %p166
      %p168 = pneg %p167
      // Predicated region
      $region25: #{tpu_custom_call.1} parent=5 // pred_check
        _
      $region26: #{tpu_custom_call.1} parent=5 // pred_check_branch
        %170 = sbr.rel (%p167) target = $region28
      $region27: #{tpu_custom_call.1} parent=5 // pred_region
        %s171 = ssub.s32 %s15, 1
        %s172 = sand.u32 %s42, 1
        %s173 = scalar_lea.sflag [#allocation3], %s172
        %s174 = sand.u32 %s42, 1
        %s175 = smul.addr %s174, 16
        %s176 = scalar_lea.vmem [#allocation2], %s175
        // Predicated region
        $region29: #{tpu_custom_call.1} parent=27 // pred_check
          %p177 = pneg %p55
        $region30: #{tpu_custom_call.1} parent=27 // pred_check_branch
          %179 = sbr.rel (%p177) target = $region32
        $region31: #{tpu_custom_call.1} parent=27 // pred_region
          %180 = dma.done %s173, 256
        $region32: #{tpu_custom_call.1} parent=27 // pred_fallthru
          _
        // Predicated region
        $region33: #{tpu_custom_call.1} parent=27 // pred_check
          %p181 = pneg %p81
        $region34: #{tpu_custom_call.1} parent=27 // pred_check_branch
          %183 = sbr.rel (%p181) target = $region36
        $region35: #{tpu_custom_call.1} parent=27 // pred_region
          %184 = dma.done [#allocation6], 256
        $region36: #{tpu_custom_call.1} parent=27 // pred_fallthru
          _
        %s185 = sand.u32 %s42, 1
        %s186 = scalar_lea.sflag [#allocation3], %s185
        %s187 = sand.u32 %s42, 1
        %s188 = smul.addr %s187, 16
        %s189 = scalar_lea.vmem [#allocation2], %s188
        %p190 = pneg %p55
        %p191 = pneg %p52
        %p192 = pneg %p81
        %p193 = pneg %p78
        %p194 = pneg %p109
        %p195 = pneg %p106
        %s196 = sand.u32 %s96, 1
        %s197 = scalar_lea.sflag [#allocation4], %s196
        %s198 = sand.u32 %s96, 1
        %s199 = smul.addr %s198, 16
        %s200 = scalar_lea.vmem [#allocation7], %s199
        %v201 = vld [vmem:[#allocation5] sm:$0xff]
        %v202 = vld [vmem:[#allocation5 + $0x8] sm:$0xff]
        %v203 = vld [vmem:[%s176] sm:$0xff]
        %v204 = vld [vmem:[%s176 + $0x8] sm:$0xff]
        %v205 = vadd.f32 %v203, %v201
        %v206 = vadd.f32 %v204, %v202
        %207 = vst [vmem:[%s200] sm:$0xff] %v205
        %208 = vst [vmem:[%s200 + $0x8] sm:$0xff] %v206
        %s209 = sand.u32 %s96, 1
        %s210 = scalar_lea.sflag [#allocation4], %s209
        %s211 = sand.u32 %s96, 1
        %s212 = smul.addr %s211, 16
        %s213 = scalar_lea.vmem [#allocation7], %s212
        // Predicated region
        $region37: #{tpu_custom_call.1} parent=27 // pred_check
          %p214 = pneg %p106
        $region38: #{tpu_custom_call.1} parent=27 // pred_check_branch
          %216 = sbr.rel (%p214) target = $region40
        $region39: #{tpu_custom_call.1} parent=27 // pred_region
          %s218 = ssub.s32 256, 256
          %219 = vsyncadd %s210, %s218
          %s220 = smul.addr %s25, 2
          %s221 = sadd.s32 %s24, %s220
          %s222 = smul.addr %s221, 128
          %s223 = scalar_lea.hbm %s2, %s222
          %s224 = sshll.u32 %s213, 4
          %s225 = int_to_ptr.vmem [resolvable:$true] %s224
          %230 = dma.vmem_to_hbm [thread:$0]  %s225, 256, %s223, %s210, 128, 128, 8
        $region40: #{tpu_custom_call.1} parent=27 // pred_fallthru
          _
      $region28: #{tpu_custom_call.1} parent=5 // pred_fallthru
        _
      %p231 = scmp.le.s32.totalorder 2, %s15
      // Predicated region
      $region41: #{tpu_custom_call.1} parent=5 // pred_check
        %p232 = pneg %p231
      $region42: #{tpu_custom_call.1} parent=5 // pred_check_branch
        %234 = sbr.rel (%p232) target = $region44
      $region43: #{tpu_custom_call.1} parent=5 // pred_region
        %s235 = ssub.s32 %s15, 2
        // Predicated region
        $region45: #{tpu_custom_call.1} parent=43 // pred_check
          %p236 = pneg %p112
        $region46: #{tpu_custom_call.1} parent=43 // pred_check_branch
          %238 = sbr.rel (%p236) target = $region48
        $region47: #{tpu_custom_call.1} parent=43 // pred_region
          %s239 = sand.u32 %s97, 1
          %s240 = scalar_lea.sflag [#allocation4], %s239
          %s241 = sand.u32 %s97, 1
          %s242 = smul.addr %s241, 16
          %s243 = scalar_lea.vmem [#allocation7], %s242
          %244 = dma.done %s240, 256
        $region48: #{tpu_custom_call.1} parent=43 // pred_fallthru
          _
      $region44: #{tpu_custom_call.1} parent=5 // pred_fallthru
        _
    $region6: #{tpu_custom_call.1} parent=1 // loop_footer
      %s19 = sadd.s32 1, %s15
    $region7: #{tpu_custom_call.1} parent=1 // loop_footer_branch
      %14 = sbr.rel target = $region3
    $region8: #{tpu_custom_call.1} parent=1 // loop_exit
      _
    %245 = vsyncpa [#allocation3], 1
    %s246 = scalar_lea.sflag [#allocation3], 1
    %247 = vsyncpa %s246, 1
    %248 = vsyncpa [#allocation6], 1
    %249 = vsyncpa [#allocation4], 1
    %s250 = scalar_lea.sflag [#allocation4], 1
    %251 = vsyncpa %s250, 1

</llo_original>
